<compile_context>
chip_gen: v6e
topology: v6e:2x2x1
jax: 0.10.0
libtpu: 0.0.40
codegen_flags: <defaults>
</compile_context>

<pallas_src>
import jax
import jax.numpy as jnp
from jax import lax
from jax.experimental import pallas as pl
from jax.experimental.pallas import tpu as pltpu

EPS = 1e-6
LANES = 128


def _chip_defaults():
    """(tile_rows, splits) tuned per TPU generation; conservative if unknown."""
    kind = ""
    try:
        kind = jax.devices()[0].device_kind.lower().replace(" ", "")
    except Exception:
        pass
    if "v7" in kind or "7x" in kind:
        # 2 TensorCores + ~3.2 TB/s HBM: bigger tiles, 2-way parallel split.
        # In-flight VMEM: 8192x128 f32 x 2 inputs x 2 buffers = 16 MiB (< 32 MiB scoped).
        return 8192, 2
    if "v6" in kind:
        # Single TC, 32 MiB scoped-VMEM default: 16 MiB in-flight is safe.
        return 8192, 1
    # v5e (16 MiB scoped-VMEM default) and anything unrecognized: 8 MiB in-flight.
    return 4096, 1


def _make_kernel(tile, bps, blocks_total, rows, need_mask):
    """Charbonnier-sum kernel with trace-time constants closed over."""

    def kernel(x_ref, y_ref, o_ref):
        # Output block (1, 8, LANES) is VMEM-resident across the inner axis
        # (index_map independent of it) -> use it directly as the accumulator.
        @pl.when(pl.program_id(1) == 0)
        def _init():
            o_ref[...] = jnp.zeros_like(o_ref)

        d = x_ref[...].astype(jnp.float32) - y_ref[...].astype(jnp.float32)
        err = jnp.sqrt(d * d + jnp.float32(EPS))

        def _accumulate(e):
            if tile % 8 == 0:
                # Pure vreg-wise VPU adds into a single (8,128) accumulator tile.
                o_ref[0] += e.reshape(tile // 8, 8, LANES).sum(axis=0)
            else:
                # Tiny-slab fallback (rows < 8 or rows % 8 != 0, single block):
                # one sublane reduce on a small block is negligible.
                o_ref[0, 0:1, :] += e.sum(axis=0, keepdims=True)

        if need_mask:
            # Logical (unclamped) block id under the (splits, blocks_per_split) grid.
            blk = pl.program_id(0) * bps + pl.program_id(1)

            # Interior blocks: mask-free fast path (vast majority of the work).
            @pl.when(blk < blocks_total - 1)
            def _fast():
                _accumulate(err)

            # Boundary blocks only: last real block (possibly row-padded by
            # Pallas) and any clamped duplicate block from the split.  The row
            # mask zeroes (a) rows past `rows` in the last block and (b) the
            # entire contribution of duplicate blocks (row0 >= rows there).
            @pl.when(blk >= blocks_total - 1)
            def _boundary():
                row0 = blk * tile
                gr = row0 + lax.broadcasted_iota(jnp.int32, (tile, LANES), 0)
                _accumulate(jnp.where(gr < rows, err, jnp.float32(0.0)))
        else:
            _accumulate(err)

    return kernel


def l1_charbonnier_loss(x, y, *, tile_rows=None, splits=None):
    assert x.shape == y.shape
    n = int(x.size)
    if n == 0:
        return jnp.float32(0.0)

    def_tile, def_splits = _chip_defaults()
    if tile_rows is None:
        tile_rows = def_tile
    if splits is None:
        splits = def_splits

    xf = x.reshape(-1)
    yf = y.reshape(-1)
    rows = n // LANES
    rem = n - rows * LANES

    # Ragged tail (< 128 elements): handled with plain jnp in the wrapper.
    # This keeps the kernel free of lane masking and avoids padding copies.
    if rem:
        xt = xf[rows * LANES:].astype(jnp.float32)
        yt = yf[rows * LANES:].astype(jnp.float32)
        dtail = xt - yt
        tail = jnp.sum(jnp.sqrt(dtail * dtail + jnp.float32(EPS)))
    else:
        tail = None

    if rows == 0:
        return tail  # everything fit in the tail

    if rem:
        x2 = xf[: rows * LANES].reshape(rows, LANES)
        y2 = yf[: rows * LANES].reshape(rows, LANES)
    else:
        # Common case: pure reshape, no HBM copy, native dtype (upcast in-kernel).
        x2 = xf.reshape(rows, LANES)
        y2 = yf.reshape(rows, LANES)

    # Tiling: big blocks amortize the ~0.35 us per-grid-step pipeline overhead.
    tile = min(tile_rows, rows)          # full-dim block if the slab is small
    blocks_total = pl.cdiv(rows, tile)
    if blocks_total < splits:
        splits = 1
    bps = pl.cdiv(blocks_total, splits)  # blocks per split

    needs_row_mask = (rows % tile) != 0            # Pallas row-pads the last block
    has_dup = splits * bps > blocks_total          # clamped duplicate block(s)
    need_mask = needs_row_mask or has_dup

    def idx_map(c, i):
        # Clamp so a dangling block of the last split re-reads the final valid
        # block; its contribution is zeroed by the boundary mask in-kernel.
        return (jnp.minimum(c * bps + i, blocks_total - 1), 0)

    kernel = _make_kernel(tile, bps, blocks_total, rows, need_mask)

    itemsize = jnp.dtype(x.dtype).itemsize
    cost = pl.CostEstimate(
        flops=3 * n,
        transcendentals=n,
        bytes_accessed=2 * rows * LANES * itemsize + splits * 8 * LANES * 4,
    )

    # TODO(synk): on v7x, verify in xprof that the leading "parallel" axis is
    # sharded across both TensorCores; if not, switch it to pltpu.CORE_PARALLEL.
    out = pl.pallas_call(
        kernel,
        out_shape=jax.ShapeDtypeStruct((splits, 8, LANES), jnp.float32),
        grid_spec=pltpu.PrefetchScalarGridSpec(
            num_scalar_prefetch=0,
            grid=(splits, bps),
            in_specs=[
                pl.BlockSpec((tile, LANES), idx_map),
                pl.BlockSpec((tile, LANES), idx_map),
            ],
            out_specs=pl.BlockSpec((1, 8, LANES), lambda c, i: (c, 0, 0)),
        ),
        compiler_params=pltpu.CompilerParams(
            dimension_semantics=("parallel", "arbitrary"),
        ),
        cost_estimate=cost,
    )(x2, y2)

    # Final cross-lane/sublane reduce of the (splits, 8, 128) partials: trivial.
    total = jnp.sum(out)
    if tail is not None:
        total = total + tail
    return total


if __name__ == "__main__":
    key = jax.random.PRNGKey(0)
    kx, ky = jax.random.split(key)

    # Primary example: NCHW inputs, consistent with typical use of this loss.
    x = jax.random.normal(kx, (2, 4, 16, 16), dtype=jnp.float32)
    y = jax.random.normal(ky, (2, 4, 16, 16), dtype=jnp.float32)
    loss = jax.block_until_ready(l1_charbonnier_loss(x, y))
    ref = jnp.sum(jnp.sqrt((x - y) ** 2 + EPS))
    assert jnp.allclose(loss, ref, rtol=1e-5, atol=1e-5), (loss, ref)

    # Multi-block path with forced 2-way split + row-padded last block +
    # clamped duplicate block (boundary-mask path), deterministic on any chip.
    xb = jax.random.normal(kx, (2, 4, 64, 131), dtype=jnp.float32)
    yb = jax.random.normal(ky, (2, 4, 64, 131), dtype=jnp.float32)
    loss_b = jax.block_until_ready(
        l1_charbonnier_loss(xb, yb, tile_rows=64, splits=2))
    ref_b = jnp.sum(jnp.sqrt((xb - yb) ** 2 + EPS))
    assert jnp.allclose(loss_b, ref_b, rtol=1e-5, atol=1e-4), (loss_b, ref_b)

    # Ragged-tail (n % 128 != 0) + small-slab (rows % 8 != 0) fallback path.
    xr = jax.random.normal(kx, (3, 5, 7, 11), dtype=jnp.float32)
    yr = jax.random.normal(ky, (3, 5, 7, 11), dtype=jnp.float32)
    loss_r = jax.block_until_ready(l1_charbonnier_loss(xr, yr))
    ref_r = jnp.sum(jnp.sqrt((xr - yr) ** 2 + EPS))
    assert jnp.allclose(loss_r, ref_r, rtol=1e-5, atol=1e-5), (loss_r, ref_r)

    # bf16 inputs (upcast happens in-kernel).
    xh = jax.random.normal(kx, (2, 4, 32, 32), dtype=jnp.bfloat16)
    yh = jax.random.normal(ky, (2, 4, 32, 32), dtype=jnp.bfloat16)
    loss_h = jax.block_until_ready(l1_charbonnier_loss(xh, yh))
    ref_h = jnp.sum(jnp.sqrt((xh.astype(jnp.float32) - yh.astype(jnp.float32)) ** 2 + EPS))
    assert jnp.allclose(loss_h, ref_h, rtol=1e-3, atol=1e-2), (loss_h, ref_h)

    print("KERNEL_OK")
</pallas_src>

<mosaic_0001>
module attributes {stable_mosaic.version = 11 : i64} {
  func.func @kernel(%arg0: i32, %arg1: i32, %arg2: memref<16x128xf32, #tpu.memory_space<vmem>>, %arg3: memref<16x128xf32, #tpu.memory_space<vmem>>, %arg4: memref<1x8x128xf32, #tpu.memory_space<vmem>>) attributes {dimension_semantics = [#tpu.dimension_semantics<parallel>, #tpu.dimension_semantics<arbitrary>], iteration_bounds = array<i64: 1, 1>, scalar_prefetch = 0 : i64, scratch_operands = 0 : i64, tpu.core_type = #tpu.core_type<tc>, window_params = [{transform_indices = @transform_0, window_bounds = array<i64: 16, 128>}, {transform_indices = @transform_1, window_bounds = array<i64: 16, 128>}, {transform_indices = @transform_2, window_bounds = array<i64: 1, 8, 128>}]} {
    %c0_i32 = arith.constant 0 : i32
    %0 = arith.cmpi eq, %arg1, %c0_i32 : i32
    %1 = arith.extui %0 : i1 to i32
    %c0_i32_0 = arith.constant 0 : i32
    %2 = arith.cmpi ne, %1, %c0_i32_0 : i32
    scf.if %2 {
      %cst_11 = arith.constant 0.000000e+00 : f32
      %18 = vector.broadcast %cst_11 : f32 to vector<1x8x128xf32>
      %c0_12 = arith.constant 0 : index
      %c0_13 = arith.constant 0 : index
      %c0_14 = arith.constant 0 : index
      %19 = vector.load %arg4[%c0_12, %c0_13, %c0_14] : memref<1x8x128xf32, #tpu.memory_space<vmem>>, vector<1x8x128xf32>
      tpu.vector_store %arg4[%c0_12, %c0_13, %c0_14], %18 {strides = array<i32>} : memref<1x8x128xf32, #tpu.memory_space<vmem>>, vector<1x8x128xf32>,
    } else {
    }
    %c0 = arith.constant 0 : index
    %c0_1 = arith.constant 0 : index
    %3 = vector.load %arg2[%c0, %c0_1] : memref<16x128xf32, #tpu.memory_space<vmem>>, vector<16x128xf32>
    %c0_2 = arith.constant 0 : index
    %c0_3 = arith.constant 0 : index
    %4 = vector.load %arg3[%c0_2, %c0_3] : memref<16x128xf32, #tpu.memory_space<vmem>>, vector<16x128xf32>
    %5 = arith.subf %3, %4 : vector<16x128xf32>
    %6 = arith.mulf %5, %5 : vector<16x128xf32>
    %cst = arith.constant 9.99999997E-7 : f32
    %7 = vector.broadcast %cst : f32 to vector<16x128xf32>
    %8 = arith.addf %6, %7 : vector<16x128xf32>
    %9 = math.sqrt %8 : vector<16x128xf32>
    %c0_4 = arith.constant 0 : index
    %c0_5 = arith.constant 0 : index
    %c0_6 = arith.constant 0 : index
    %10 = vector.load %arg4[%c0_4, %c0_5, %c0_6] : memref<1x8x128xf32, #tpu.memory_space<vmem>>, vector<1x8x128xf32>
    %11 = vector.shape_cast %10 : vector<1x8x128xf32> to vector<8x128xf32>
    %12 = vector.shape_cast %9 : vector<16x128xf32> to vector<2x8x128xf32>
    %cst_7 = arith.constant dense<0.000000e+00> : vector<8x128xf32>
    %13 = vector.multi_reduction <add>, %12, %cst_7 [0] : vector<2x8x128xf32> to vector<8x128xf32>
    %14 = arith.addf %11, %13 : vector<8x128xf32>
    %c0_8 = arith.constant 0 : index
    %c0_9 = arith.constant 0 : index
    %c0_10 = arith.constant 0 : index
    %15 = vector.load %arg4[%c0_8, %c0_9, %c0_10] : memref<1x8x128xf32, #tpu.memory_space<vmem>>, vector<1x8x128xf32>
    %16 = vector.shape_cast %15 : vector<1x8x128xf32> to vector<8x128xf32>
    %17 = vector.shape_cast %14 : vector<8x128xf32> to vector<1x8x128xf32>
    tpu.vector_store %arg4[%c0_8, %c0_9, %c0_10], %17 {strides = array<i32>} : memref<1x8x128xf32, #tpu.memory_space<vmem>>, vector<1x8x128xf32>,
    return
  }
  func.func @transform_0(%arg0: i32, %arg1: i32) -> (i32, i32) {
    %c1_i32 = arith.constant 1 : i32
    %0 = arith.muli %arg0, %c1_i32 : i32
    %1 = arith.addi %0, %arg1 : i32
    %c0_i32 = arith.constant 0 : i32
    %2 = arith.minsi %1, %c0_i32 : i32
    %c0_i32_0 = arith.constant 0 : i32
    %c0_i32_1 = arith.constant 0 : i32
    return %2, %c0_i32_0 : i32, i32
  }
  func.func @transform_1(%arg0: i32, %arg1: i32) -> (i32, i32) {
    %c1_i32 = arith.constant 1 : i32
    %0 = arith.muli %arg0, %c1_i32 : i32
    %1 = arith.addi %0, %arg1 : i32
    %c0_i32 = arith.constant 0 : i32
    %2 = arith.minsi %1, %c0_i32 : i32
    %c0_i32_0 = arith.constant 0 : i32
    %c0_i32_1 = arith.constant 0 : i32
    return %2, %c0_i32_0 : i32, i32
  }
  func.func @transform_2(%arg0: i32, %arg1: i32) -> (i32, i32, i32) {
    %c0_i32 = arith.constant 0 : i32
    %c0_i32_0 = arith.constant 0 : i32
    %c0_i32_1 = arith.constant 0 : i32
    return %arg0, %c0_i32, %c0_i32_0 : i32, i32, i32
  }
}

</mosaic_0001>

<llo_original>
// kernel: tpu_custom_call.1
$region0: #{tpu_custom_call.1}
  #allocation0 [shape = 'u32[]', space=smem, size = 0x4, offset = 0x4, fixed_abs, tag = 'smem constant byte address 0x4 - core index']
  #allocation1 [shape = 'u32[144,128]{1,0:T(1,128)}', space=vmem, size = 0x12000, scoped, tag = 'internal scratch']
  %s0 = inlined_call_operand.hbm [shape: f32[16,128], index: 0, kind: input, shape index: {}]
  %s1 = inlined_call_operand.hbm [shape: f32[16,128], index: 1, kind: input, shape index: {}]
  %s2 = inlined_call_operand.hbm [shape: f32[1,8,128], index: 2, kind: output, shape index: {}]
  %s3 = sld [smem:[#allocation0]]
  $region30: #{tpu_custom_call.1} parent=0
    _
  %s5 = ssub.s32 1, %s3
  %s6 = scalar_select 0, %s5, %s3
  $region1: #{tpu_custom_call.1} parent=0
    #allocation2 [shape = 'u8[8192]{0}', space=vmem, size = 0x2000, scoped, tag = 'input window, operand 0, single buffered']
    #allocation3 [shape = 's32[1]{0}', space=sflag, size = 0x4, scoped, tag = 'scoped memory for tpu_custom_call.1']
    #allocation4 [shape = 's32[1]{0}', space=sflag, size = 0x4, scoped, tag = 'scoped memory for tpu_custom_call.1']
    #allocation5 [shape = 'u8[8192]{0}', space=vmem, size = 0x2000, scoped, tag = 'input window, operand 1, single buffered']
    #allocation6 [shape = 's32[1]{0}', space=sflag, size = 0x4, scoped, tag = 'scoped memory for tpu_custom_call.1']
    #allocation7 [shape = 'u8[4096]{0}', space=vmem, size = 0x1000, scoped, tag = 'output window, operand 0, single buffered']
    %7 = vsyncpa [#allocation3], 0
    %8 = vsyncpa [#allocation6], 0
    %9 = vsyncpa [#allocation4], 0
    // Predicated region
    $region2: #{tpu_custom_call.1} parent=1 // pred_check
      _
    $region3: #{tpu_custom_call.1} parent=1 // pred_check_branch
      %11 = sbr.rel (0) target = $region5
    $region4: #{tpu_custom_call.1} parent=1 // pred_region
      %s12 = sadd.s32 0, 0
      %p13 = scmp.lt.s32.totalorder %s12, 0
      %s14 = scalar_select %p13, %s12, 0
      %s15 = smul.u32 2, %s14
      %s17 = ssub.s32 256, 256
      %18 = vsyncadd [#allocation3], %s17
      %s19 = smul.addr %s15, 128
      %s20 = scalar_lea.hbm %s0, %s19
      %s21 = sshll.u32 [#allocation2], 4
      %s22 = int_to_ptr.vmem [resolvable:$true] %s21
      %27 = dma.hbm_to_vmem [thread:$0]  %s20, 256, %s22, [#allocation3], 128, 128, 8
    $region5: #{tpu_custom_call.1} parent=1 // pred_fallthru
      _
    // Predicated region
    $region6: #{tpu_custom_call.1} parent=1 // pred_check
      _
    $region7: #{tpu_custom_call.1} parent=1 // pred_check_branch
      %29 = sbr.rel (0) target = $region9
    $region8: #{tpu_custom_call.1} parent=1 // pred_region
      %s30 = sadd.s32 0, 0
      %p31 = scmp.lt.s32.totalorder %s30, 0
      %s32 = scalar_select %p31, %s30, 0
      %s33 = smul.u32 2, %s32
      %s35 = ssub.s32 256, 256
      %36 = vsyncadd [#allocation6], %s35
      %s37 = smul.addr %s33, 128
      %s38 = scalar_lea.hbm %s1, %s37
      %s39 = sshll.u32 [#allocation5], 4
      %s40 = int_to_ptr.vmem [resolvable:$true] %s39
      %45 = dma.hbm_to_vmem [thread:$0]  %s38, 256, %s40, [#allocation6], 128, 128, 8
    $region9: #{tpu_custom_call.1} parent=1 // pred_fallthru
      _
    // Predicated region
    $region10: #{tpu_custom_call.1} parent=1 // pred_check
      _
    $region11: #{tpu_custom_call.1} parent=1 // pred_check_branch
      %47 = sbr.rel (0) target = $region13
    $region12: #{tpu_custom_call.1} parent=1 // pred_region
      %48 = dma.done [#allocation3], 256
    $region13: #{tpu_custom_call.1} parent=1 // pred_fallthru
      _
    // Predicated region
    $region14: #{tpu_custom_call.1} parent=1 // pred_check
      _
    $region15: #{tpu_custom_call.1} parent=1 // pred_check_branch
      %50 = sbr.rel (0) target = $region17
    $region16: #{tpu_custom_call.1} parent=1 // pred_region
      %51 = dma.done [#allocation6], 256
    $region17: #{tpu_custom_call.1} parent=1 // pred_fallthru
      _
    %s52 = sadd.s32 0, 0
    %p53 = scmp.lt.s32.totalorder %s52, 0
    %s54 = scalar_select %p53, %s52, 0
    %s55 = smul.u32 2, %s54
    %s56 = sadd.s32 0, 0
    %p57 = scmp.lt.s32.totalorder %s56, 0
    %s58 = scalar_select %p57, %s56, 0
    %s59 = smul.u32 2, %s58
    %p60 = scmp.eq.s32.totalorder 0, 0
    // Predicated region
    $region18: #{tpu_custom_call.1} parent=1 // pred_check
      %p61 = pneg %p60
    $region19: #{tpu_custom_call.1} parent=1 // pred_check_branch
      %63 = sbr.rel (%p61) target = $region21
    $region20: #{tpu_custom_call.1} parent=1 // pred_region
      %64 = vst [vmem:[#allocation7] sm:$0xff] 0.0
    $region21: #{tpu_custom_call.1} parent=1 // pred_fallthru
      _
    %v65 = vld [vmem:[#allocation2] sm:$0xff]
    %v66 = vld [vmem:[#allocation2 + $0x8] sm:$0xff]
    %v67 = vld [vmem:[#allocation5] sm:$0xff]
    %v68 = vld [vmem:[#allocation5 + $0x8] sm:$0xff]
    %v69 = vsub.f32 %v65, %v67
    %v70 = vsub.f32 %v66, %v68
    %v71 = vmul.f32 %v69, %v69
    %v72 = vmul.f32 %v70, %v70
    %v73 = vadd.f32 %v71, 1e-06
    %v74 = vadd.f32 %v72, 1e-06
    %v75 = vrsqrt.pop %v73
    %v76 = vmul.f32 %v73, %v75
    %vm77 = vcmp.eq.f32.partialorder %v73, inf
    %v78 = vsel %vm77, %v73, %v76
    %vm79 = vcmp.eq.f32.partialorder %v73, 0.0
    %v80 = vand.u32 %v73, 2147483648
    %v81 = vsel %vm79, %v80, %v78
    %v82 = vrsqrt.pop %v74
    %v83 = vmul.f32 %v74, %v82
    %vm84 = vcmp.eq.f32.partialorder %v74, inf
    %v85 = vsel %vm84, %v74, %v83
    %vm86 = vcmp.eq.f32.partialorder %v74, 0.0
    %v87 = vand.u32 %v74, 2147483648
    %v88 = vsel %vm86, %v87, %v85
    %v89 = vld [vmem:[#allocation7] sm:$0xff]
    %v90 = vadd.f32 %v81, %v88
    %v91 = vadd.f32 %v89, %v90
    %92 = vst [vmem:[#allocation7] sm:$0xff] %v91
    // Predicated region
    $region22: #{tpu_custom_call.1} parent=1 // pred_check
      _
    $region23: #{tpu_custom_call.1} parent=1 // pred_check_branch
      %94 = sbr.rel (0) target = $region25
    $region24: #{tpu_custom_call.1} parent=1 // pred_region
      %s96 = ssub.s32 128, 128
      %97 = vsyncadd [#allocation4], %s96
      %s99 = sshll.u32 [#allocation7], 4
      %s100 = int_to_ptr.vmem [resolvable:$true] %s99
      %102 = dma.vmem_to_hbm [thread:$0]  %s100, 128, %s2, [#allocation4]
    $region25: #{tpu_custom_call.1} parent=1 // pred_fallthru
      _
    // Predicated region
    $region26: #{tpu_custom_call.1} parent=1 // pred_check
      _
    $region27: #{tpu_custom_call.1} parent=1 // pred_check_branch
      %104 = sbr.rel (0) target = $region29
    $region28: #{tpu_custom_call.1} parent=1 // pred_region
      %105 = dma.done [#allocation4], 128
    $region29: #{tpu_custom_call.1} parent=1 // pred_fallthru
      _
    %106 = vsyncpa [#allocation3], 1
    %107 = vsyncpa [#allocation6], 1
    %108 = vsyncpa [#allocation4], 1

</llo_original>
